<compile_context>
chip_gen: v5e
topology: v5e:2x2
jax: 0.10.0
libtpu: 0.0.40
codegen_flags: <defaults>
</compile_context>

<pallas_src>
import jax
import jax.numpy as jnp
from jax import lax
from jax.experimental import pallas as pl
from jax.experimental.pallas import tpu as pltpu

# ---------------- problem configuration (matches DilConv __init__) ----------
N = 2          # batch
C_IN = 4
C_OUT = 8
K = 3          # kernel_size
STRIDE = 1
PAD = 2        # padding
DIL = 2        # dilation
H = W = 16
EPS = 1e-5     # BatchNorm2d default eps

HO = (H + 2 * PAD - DIL * (K - 1) - 1) // STRIDE + 1
WO = (W + 2 * PAD - DIL * (K - 1) - 1) // STRIDE + 1
HW = H * W
NHW = N * HW

# The roll-based depthwise tap trick relies on the output grid matching the
# input grid (stride 1, "same"-sized output), which holds for this config.
assert STRIDE == 1 and HO == H and WO == W
# Cheap row/col extraction relies on power-of-two W / HW.
assert (W & (W - 1)) == 0 and (HW & (HW - 1)) == 0
LOG2_W = W.bit_length() - 1


def dilconv_kernel(x_ref, dw_ref, pw_ref, gamma_ref, beta_ref, out_ref):
    # x_ref     : (N, C_IN, HW)   f32 VMEM, unpadded flattened input (NCHW)
    # dw_ref    : (C_IN, K*K)     f32 VMEM, depthwise weights (channel-major)
    # pw_ref    : (C_OUT, C_IN)   f32 VMEM, 1x1 pointwise weights
    # gamma_ref : (C_OUT, 1)      f32 VMEM, BN affine scale
    # beta_ref  : (C_OUT, 1)      f32 VMEM, BN affine shift
    # out_ref   : (N, C_OUT, HW)  f32 VMEM, lane-dense output

    # ---- boundary masks over the lane-concatenated batch (built once) ------
    # Dilated taps reach outside the image; out-of-bounds taps contribute 0,
    # which is exact since PyTorch zero-pads *after* ReLU and relu(0) == 0.
    lane = lax.broadcasted_iota(jnp.int32, (1, NHW), 1)
    lane_hw = lane & (HW - 1)              # position within one image plane
    row = lane_hw >> LOG2_W
    col = lane_hw & (W - 1)

    nz_offs = sorted({k * DIL - PAD for k in range(K)} - {0})
    rmask = {d: ((row >= -d) & (row < H - d)).astype(jnp.float32) for d in nz_offs}
    cmask = {d: ((col >= -d) & (col < W - d)).astype(jnp.float32) for d in nz_offs}

    # ---- hoisted, masked per-tap depthwise weights --------------------------
    dw = dw_ref[...]                       # (C_IN, K*K)
    taps = []                              # list of (flat lane shift, tap weight)
    for kh in range(K):
        dh = kh * DIL - PAD
        for kw in range(K):
            dv = kw * DIL - PAD
            t = kh * K + kw
            w_col = dw[:, t:t + 1]         # (C_IN, 1)
            m = None
            if dh != 0:
                m = rmask[dh]
            if dv != 0:
                m = cmask[dv] if m is None else m * cmask[dv]
            tapw = w_col if m is None else w_col * m   # (C_IN,1) or (C_IN,NHW)
            taps.append((dh * W + dv, tapw))

    # ---- ReLU on the lane-concatenated batch --------------------------------
    # (C_IN, N*HW): batch lives in lanes, so the whole batch is one pass.
    x_all = jnp.maximum(
        jnp.concatenate([x_ref[n] for n in range(N)], axis=1), 0.0)

    # ---- depthwise dilated conv: one roll (XLU) + one FMA (VALU) per tap ----
    # shifted[p] == x_all[p + s]; every lane where the roll wraps (image edge
    # or batch boundary) has tap weight 0 via the masks folded into tapw.
    acc = jnp.zeros((C_IN, NHW), jnp.float32)
    for s, tapw in taps:
        shifted = x_all if s == 0 else pltpu.roll(x_all, shift=(-s) % NHW, axis=1)
        acc = acc + shifted * tapw

    # ---- 1x1 pointwise conv: one MXU matmul (C_OUT,C_IN)@(C_IN,N*HW) --------
    y = jnp.dot(pw_ref[...], acc, preferred_element_type=jnp.float32)  # (C_OUT, NHW)

    # ---- BatchNorm2d (training-mode batch statistics), two lane reductions --
    # TODO(synk): running_mean / running_var buffer updates (stateful) are not
    # modeled; forward output matches a freshly constructed BN in train mode.
    inv_count = 1.0 / float(N * HO * WO)
    mu = y.sum(axis=1, keepdims=True) * inv_count          # (C_OUT, 1)
    yc = y - mu
    var = (yc * yc).sum(axis=1, keepdims=True) * inv_count  # biased variance
    scale = gamma_ref[...] * lax.rsqrt(var + EPS)            # (C_OUT, 1)
    y_bn = yc * scale + beta_ref[...]                         # (C_OUT, NHW)

    # ---- lane-dense stores back to (N, C_OUT, HW) ----------------------------
    for n in range(N):
        out_ref[n] = y_bn[:, n * HW:(n + 1) * HW]            # full-lane stores


@jax.jit
def dilconv_forward(x, dw_w, pw_w, gamma, beta):
    # Metadata-only reshapes; no jnp.pad, no transposes of the activation.
    xf = x.reshape(N, C_IN, HW)
    dwf = dw_w.reshape(C_IN, K * K)
    g = gamma.reshape(C_OUT, 1)
    b = beta.reshape(C_OUT, 1)

    out_flat = pl.pallas_call(
        dilconv_kernel,
        out_shape=jax.ShapeDtypeStruct((N, C_OUT, HW), jnp.float32),
        in_specs=[
            pl.BlockSpec(memory_space=pltpu.MemorySpace.VMEM),  # x (flat)
            pl.BlockSpec(memory_space=pltpu.MemorySpace.VMEM),  # depthwise w
            pl.BlockSpec(memory_space=pltpu.MemorySpace.VMEM),  # pointwise w
            pl.BlockSpec(memory_space=pltpu.MemorySpace.VMEM),  # gamma
            pl.BlockSpec(memory_space=pltpu.MemorySpace.VMEM),  # beta
        ],
        out_specs=pl.BlockSpec(memory_space=pltpu.MemorySpace.VMEM),
    )(xf, dwf, pw_w, g, b)

    return out_flat.reshape(N, C_OUT, HO, WO)


def dilconv_reference(x, dw_w, pw_w, gamma, beta):
    """Pure-JAX reference mirroring the PyTorch forward (training-mode BN)."""
    xr = jnp.maximum(x, 0.0)
    dw = lax.conv_general_dilated(
        xr, dw_w.reshape(C_IN, 1, K, K),
        window_strides=(STRIDE, STRIDE),
        padding=[(PAD, PAD), (PAD, PAD)],
        rhs_dilation=(DIL, DIL),
        dimension_numbers=("NCHW", "OIHW", "NCHW"),
        feature_group_count=C_IN,
    )
    pw = lax.conv_general_dilated(
        dw, pw_w.reshape(C_OUT, C_IN, 1, 1),
        window_strides=(1, 1),
        padding=[(0, 0), (0, 0)],
        dimension_numbers=("NCHW", "OIHW", "NCHW"),
    )
    mu = jnp.mean(pw, axis=(0, 2, 3), keepdims=True)
    var = jnp.mean((pw - mu) ** 2, axis=(0, 2, 3), keepdims=True)
    yn = (pw - mu) * lax.rsqrt(var + EPS)
    return yn * gamma.reshape(1, C_OUT, 1, 1) + beta.reshape(1, C_OUT, 1, 1)


if __name__ == "__main__":
    key = jax.random.PRNGKey(0)
    kx, kdw, kpw, kg, kb = jax.random.split(key, 5)

    x = jax.random.normal(kx, (N, C_IN, H, W), dtype=jnp.float32)
    # nn.Conv2d depthwise weight (C_in, 1, K, K) -> stored as (C_in, K, K)
    dw_w = jax.random.normal(kdw, (C_IN, K, K), dtype=jnp.float32) * 0.2
    # nn.Conv2d pointwise weight (C_out, C_in, 1, 1) -> (C_out, C_in)
    pw_w = jax.random.normal(kpw, (C_OUT, C_IN), dtype=jnp.float32) * 0.2
    # BatchNorm affine params (affine=True)
    gamma = 1.0 + 0.1 * jax.random.normal(kg, (C_OUT,), dtype=jnp.float32)
    beta = 0.1 * jax.random.normal(kb, (C_OUT,), dtype=jnp.float32)

    out = jax.block_until_ready(dilconv_forward(x, dw_w, pw_w, gamma, beta))
    ref = dilconv_reference(x, dw_w, pw_w, gamma, beta)

    assert out.shape == (N, C_OUT, HO, WO)
    assert jnp.allclose(out, ref, atol=2e-4, rtol=2e-4), (
        f"max abs err {jnp.max(jnp.abs(out - ref))}")

    print("KERNEL_OK")
</pallas_src>

<mosaic_0001>
module attributes {stable_mosaic.version = 11 : i64} {
  func.func @dilconv_kernel(%arg0: memref<2x4x256xf32, #tpu.memory_space<vmem>>, %arg1: memref<4x9xf32, #tpu.memory_space<vmem>>, %arg2: memref<8x4xf32, #tpu.memory_space<vmem>>, %arg3: memref<8x1xf32, #tpu.memory_space<vmem>>, %arg4: memref<8x1xf32, #tpu.memory_space<vmem>>, %arg5: memref<2x8x256xf32, #tpu.memory_space<vmem>>) attributes {dimension_semantics = [], scalar_prefetch = 0 : i64, scratch_operands = 0 : i64, tpu.core_type = #tpu.core_type<tc>} {
    %0 = tpu.iota {dimensions = array<i32: 1>} : vector<1x512xi32>
    %c255_i32 = arith.constant 255 : i32
    %1 = vector.broadcast %c255_i32 : i32 to vector<1x512xi32>
    %2 = arith.andi %0, %1 : vector<1x512xi32>
    %c4_i32 = arith.constant 4 : i32
    %3 = vector.broadcast %c4_i32 : i32 to vector<1x512xi32>
    %4 = arith.shrsi %2, %3 : vector<1x512xi32>
    %c15_i32 = arith.constant 15 : i32
    %5 = vector.broadcast %c15_i32 : i32 to vector<1x512xi32>
    %6 = arith.andi %2, %5 : vector<1x512xi32>
    %c2_i32 = arith.constant 2 : i32
    %7 = vector.broadcast %c2_i32 : i32 to vector<1x512xi32>
    %8 = arith.cmpi sge, %4, %7 : vector<1x512xi32>
    %c18_i32 = arith.constant 18 : i32
    %9 = vector.broadcast %c18_i32 : i32 to vector<1x512xi32>
    %10 = arith.cmpi slt, %4, %9 : vector<1x512xi32>
    %11 = arith.andi %8, %10 : vector<1x512xi1>
    %12 = arith.extui %11 : vector<1x512xi1> to vector<1x512xi32>
    %13 = arith.sitofp %12 : vector<1x512xi32> to vector<1x512xf32>
    %c-2_i32 = arith.constant -2 : i32
    %14 = vector.broadcast %c-2_i32 : i32 to vector<1x512xi32>
    %15 = arith.cmpi sge, %4, %14 : vector<1x512xi32>
    %c14_i32 = arith.constant 14 : i32
    %16 = vector.broadcast %c14_i32 : i32 to vector<1x512xi32>
    %17 = arith.cmpi slt, %4, %16 : vector<1x512xi32>
    %18 = arith.andi %15, %17 : vector<1x512xi1>
    %19 = arith.extui %18 : vector<1x512xi1> to vector<1x512xi32>
    %20 = arith.sitofp %19 : vector<1x512xi32> to vector<1x512xf32>
    %c2_i32_0 = arith.constant 2 : i32
    %21 = vector.broadcast %c2_i32_0 : i32 to vector<1x512xi32>
    %22 = arith.cmpi sge, %6, %21 : vector<1x512xi32>
    %c18_i32_1 = arith.constant 18 : i32
    %23 = vector.broadcast %c18_i32_1 : i32 to vector<1x512xi32>
    %24 = arith.cmpi slt, %6, %23 : vector<1x512xi32>
    %25 = arith.andi %22, %24 : vector<1x512xi1>
    %26 = arith.extui %25 : vector<1x512xi1> to vector<1x512xi32>
    %27 = arith.sitofp %26 : vector<1x512xi32> to vector<1x512xf32>
    %c-2_i32_2 = arith.constant -2 : i32
    %28 = vector.broadcast %c-2_i32_2 : i32 to vector<1x512xi32>
    %29 = arith.cmpi sge, %6, %28 : vector<1x512xi32>
    %c14_i32_3 = arith.constant 14 : i32
    %30 = vector.broadcast %c14_i32_3 : i32 to vector<1x512xi32>
    %31 = arith.cmpi slt, %6, %30 : vector<1x512xi32>
    %32 = arith.andi %29, %31 : vector<1x512xi1>
    %33 = arith.extui %32 : vector<1x512xi1> to vector<1x512xi32>
    %34 = arith.sitofp %33 : vector<1x512xi32> to vector<1x512xf32>
    %c0 = arith.constant 0 : index
    %c0_4 = arith.constant 0 : index
    %35 = vector.load %arg1[%c0, %c0_4] : memref<4x9xf32, #tpu.memory_space<vmem>>, vector<4x9xf32>
    %36 = vector.extract_strided_slice %35 {offsets = [0, 0], sizes = [4, 1], strides = [1, 1]} : vector<4x9xf32> to vector<4x1xf32>
    %37 = arith.mulf %13, %27 : vector<1x512xf32>
    %38 = vector.broadcast %36 : vector<4x1xf32> to vector<4x512xf32>
    %39 = vector.broadcast %37 : vector<1x512xf32> to vector<4x512xf32>
    %40 = arith.mulf %38, %39 : vector<4x512xf32>
    %41 = vector.extract_strided_slice %35 {offsets = [0, 1], sizes = [4, 1], strides = [1, 1]} : vector<4x9xf32> to vector<4x1xf32>
    %42 = vector.broadcast %41 : vector<4x1xf32> to vector<4x512xf32>
    %43 = vector.broadcast %13 : vector<1x512xf32> to vector<4x512xf32>
    %44 = arith.mulf %42, %43 : vector<4x512xf32>
    %45 = vector.extract_strided_slice %35 {offsets = [0, 2], sizes = [4, 1], strides = [1, 1]} : vector<4x9xf32> to vector<4x1xf32>
    %46 = arith.mulf %13, %34 : vector<1x512xf32>
    %47 = vector.broadcast %45 : vector<4x1xf32> to vector<4x512xf32>
    %48 = vector.broadcast %46 : vector<1x512xf32> to vector<4x512xf32>
    %49 = arith.mulf %47, %48 : vector<4x512xf32>
    %50 = vector.extract_strided_slice %35 {offsets = [0, 3], sizes = [4, 1], strides = [1, 1]} : vector<4x9xf32> to vector<4x1xf32>
    %51 = vector.broadcast %50 : vector<4x1xf32> to vector<4x512xf32>
    %52 = vector.broadcast %27 : vector<1x512xf32> to vector<4x512xf32>
    %53 = arith.mulf %51, %52 : vector<4x512xf32>
    %54 = vector.extract_strided_slice %35 {offsets = [0, 4], sizes = [4, 1], strides = [1, 1]} : vector<4x9xf32> to vector<4x1xf32>
    %55 = vector.extract_strided_slice %35 {offsets = [0, 5], sizes = [4, 1], strides = [1, 1]} : vector<4x9xf32> to vector<4x1xf32>
    %56 = vector.broadcast %55 : vector<4x1xf32> to vector<4x512xf32>
    %57 = vector.broadcast %34 : vector<1x512xf32> to vector<4x512xf32>
    %58 = arith.mulf %56, %57 : vector<4x512xf32>
    %59 = vector.extract_strided_slice %35 {offsets = [0, 6], sizes = [4, 1], strides = [1, 1]} : vector<4x9xf32> to vector<4x1xf32>
    %60 = arith.mulf %20, %27 : vector<1x512xf32>
    %61 = vector.broadcast %59 : vector<4x1xf32> to vector<4x512xf32>
    %62 = vector.broadcast %60 : vector<1x512xf32> to vector<4x512xf32>
    %63 = arith.mulf %61, %62 : vector<4x512xf32>
    %64 = vector.extract_strided_slice %35 {offsets = [0, 7], sizes = [4, 1], strides = [1, 1]} : vector<4x9xf32> to vector<4x1xf32>
    %65 = vector.broadcast %64 : vector<4x1xf32> to vector<4x512xf32>
    %66 = vector.broadcast %20 : vector<1x512xf32> to vector<4x512xf32>
    %67 = arith.mulf %65, %66 : vector<4x512xf32>
    %68 = vector.extract_strided_slice %35 {offsets = [0, 8], sizes = [4, 1], strides = [1, 1]} : vector<4x9xf32> to vector<4x1xf32>
    %69 = arith.mulf %20, %34 : vector<1x512xf32>
    %70 = vector.broadcast %68 : vector<4x1xf32> to vector<4x512xf32>
    %71 = vector.broadcast %69 : vector<1x512xf32> to vector<4x512xf32>
    %72 = arith.mulf %70, %71 : vector<4x512xf32>
    %c0_5 = arith.constant 0 : index
    %c0_6 = arith.constant 0 : index
    %c0_7 = arith.constant 0 : index
    %73 = vector.load %arg0[%c0_5, %c0_6, %c0_7] : memref<2x4x256xf32, #tpu.memory_space<vmem>>, vector<1x4x256xf32>
    %74 = vector.shape_cast %73 : vector<1x4x256xf32> to vector<4x256xf32>
    %c1 = arith.constant 1 : index
    %c0_8 = arith.constant 0 : index
    %c0_9 = arith.constant 0 : index
    %75 = vector.load %arg0[%c1, %c0_8, %c0_9] : memref<2x4x256xf32, #tpu.memory_space<vmem>>, vector<1x4x256xf32>
    %76 = vector.shape_cast %75 : vector<1x4x256xf32> to vector<4x256xf32>
    %77 = tpu.concatenate %74, %76 in 1 : vector<4x256xf32>, vector<4x256xf32> -> vector<4x512xf32>
    %cst = arith.constant 0.000000e+00 : f32
    %78 = vector.broadcast %cst : f32 to vector<4x512xf32>
    %79 = arith.maximumf %77, %78 : vector<4x512xf32>
    %cst_10 = arith.constant 0.000000e+00 : f32
    %80 = vector.broadcast %cst_10 : f32 to vector<4x512xf32>
    %c34_i32 = arith.constant 34 : i32
    %81 = tpu.dynamic_rotate %79 by %c34_i32 dim 1 : vector<4x512xf32>, i32 -> vector<4x512xf32>
    %82 = arith.mulf %81, %40 : vector<4x512xf32>
    %83 = arith.addf %80, %82 : vector<4x512xf32>
    %c32_i32 = arith.constant 32 : i32
    %84 = tpu.dynamic_rotate %79 by %c32_i32 dim 1 : vector<4x512xf32>, i32 -> vector<4x512xf32>
    %85 = arith.mulf %84, %44 : vector<4x512xf32>
    %86 = arith.addf %83, %85 : vector<4x512xf32>
    %c30_i32 = arith.constant 30 : i32
    %87 = tpu.dynamic_rotate %79 by %c30_i32 dim 1 : vector<4x512xf32>, i32 -> vector<4x512xf32>
    %88 = arith.mulf %87, %49 : vector<4x512xf32>
    %89 = arith.addf %86, %88 : vector<4x512xf32>
    %c2_i32_11 = arith.constant 2 : i32
    %90 = tpu.dynamic_rotate %79 by %c2_i32_11 dim 1 : vector<4x512xf32>, i32 -> vector<4x512xf32>
    %91 = arith.mulf %90, %53 : vector<4x512xf32>
    %92 = arith.addf %89, %91 : vector<4x512xf32>
    %93 = vector.broadcast %54 : vector<4x1xf32> to vector<4x512xf32>
    %94 = arith.mulf %79, %93 : vector<4x512xf32>
    %95 = arith.addf %92, %94 : vector<4x512xf32>
    %c510_i32 = arith.constant 510 : i32
    %96 = tpu.dynamic_rotate %79 by %c510_i32 dim 1 : vector<4x512xf32>, i32 -> vector<4x512xf32>
    %97 = arith.mulf %96, %58 : vector<4x512xf32>
    %98 = arith.addf %95, %97 : vector<4x512xf32>
    %c482_i32 = arith.constant 482 : i32
    %99 = tpu.dynamic_rotate %79 by %c482_i32 dim 1 : vector<4x512xf32>, i32 -> vector<4x512xf32>
    %100 = arith.mulf %99, %63 : vector<4x512xf32>
    %101 = arith.addf %98, %100 : vector<4x512xf32>
    %c480_i32 = arith.constant 480 : i32
    %102 = tpu.dynamic_rotate %79 by %c480_i32 dim 1 : vector<4x512xf32>, i32 -> vector<4x512xf32>
    %103 = arith.mulf %102, %67 : vector<4x512xf32>
    %104 = arith.addf %101, %103 : vector<4x512xf32>
    %c478_i32 = arith.constant 478 : i32
    %105 = tpu.dynamic_rotate %79 by %c478_i32 dim 1 : vector<4x512xf32>, i32 -> vector<4x512xf32>
    %106 = arith.mulf %105, %72 : vector<4x512xf32>
    %107 = arith.addf %104, %106 : vector<4x512xf32>
    %c0_12 = arith.constant 0 : index
    %c0_13 = arith.constant 0 : index
    %108 = vector.load %arg2[%c0_12, %c0_13] : memref<8x4xf32, #tpu.memory_space<vmem>>, vector<8x4xf32>
    %cst_14 = arith.constant dense<0.000000e+00> : vector<8x512xf32>
    %109 = tpu.matmul %108, %107, %cst_14 {dimension_numbers = #tpu.dot_dimension_numbers<[1], [0], [0], [1], [0, 0, 1, 1], [], []>} : vector<8x4xf32>, vector<4x512xf32>, vector<8x512xf32> -> vector<8x512xf32>
    %cst_15 = arith.constant dense<0.000000e+00> : vector<8xf32>
    %110 = vector.multi_reduction <add>, %109, %cst_15 [1] : vector<8x512xf32> to vector<8xf32>
    %111 = vector.shape_cast %110 : vector<8xf32> to vector<8x1xf32>
    %cst_16 = arith.constant 0.001953125 : f32
    %112 = vector.broadcast %cst_16 : f32 to vector<8x1xf32>
    %113 = arith.mulf %111, %112 : vector<8x1xf32>
    %114 = vector.broadcast %113 : vector<8x1xf32> to vector<8x512xf32>
    %115 = arith.subf %109, %114 : vector<8x512xf32>
    %116 = arith.mulf %115, %115 : vector<8x512xf32>
    %cst_17 = arith.constant dense<0.000000e+00> : vector<8xf32>
    %117 = vector.multi_reduction <add>, %116, %cst_17 [1] : vector<8x512xf32> to vector<8xf32>
    %118 = vector.shape_cast %117 : vector<8xf32> to vector<8x1xf32>
    %cst_18 = arith.constant 0.001953125 : f32
    %119 = vector.broadcast %cst_18 : f32 to vector<8x1xf32>
    %120 = arith.mulf %118, %119 : vector<8x1xf32>
    %c0_19 = arith.constant 0 : index
    %c0_20 = arith.constant 0 : index
    %121 = vector.load %arg3[%c0_19, %c0_20] : memref<8x1xf32, #tpu.memory_space<vmem>>, vector<8x1xf32>
    %cst_21 = arith.constant 9.99999974E-6 : f32
    %122 = vector.broadcast %cst_21 : f32 to vector<8x1xf32>
    %123 = arith.addf %120, %122 : vector<8x1xf32>
    %124 = math.rsqrt %123 : vector<8x1xf32>
    %125 = arith.mulf %121, %124 : vector<8x1xf32>
    %126 = vector.broadcast %125 : vector<8x1xf32> to vector<8x512xf32>
    %127 = arith.mulf %115, %126 : vector<8x512xf32>
    %c0_22 = arith.constant 0 : index
    %c0_23 = arith.constant 0 : index
    %128 = vector.load %arg4[%c0_22, %c0_23] : memref<8x1xf32, #tpu.memory_space<vmem>>, vector<8x1xf32>
    %129 = vector.broadcast %128 : vector<8x1xf32> to vector<8x512xf32>
    %130 = arith.addf %127, %129 : vector<8x512xf32>
    %131 = vector.extract_strided_slice %130 {offsets = [0, 0], sizes = [8, 256], strides = [1, 1]} : vector<8x512xf32> to vector<8x256xf32>
    %c0_24 = arith.constant 0 : index
    %c0_25 = arith.constant 0 : index
    %c0_26 = arith.constant 0 : index
    %132 = vector.load %arg5[%c0_24, %c0_25, %c0_26] : memref<2x8x256xf32, #tpu.memory_space<vmem>>, vector<1x8x256xf32>
    %133 = vector.shape_cast %132 : vector<1x8x256xf32> to vector<8x256xf32>
    %134 = vector.shape_cast %131 : vector<8x256xf32> to vector<1x8x256xf32>
    tpu.vector_store %arg5[%c0_24, %c0_25, %c0_26], %134 {strides = array<i32>} : memref<2x8x256xf32, #tpu.memory_space<vmem>>, vector<1x8x256xf32>,
    %135 = vector.extract_strided_slice %130 {offsets = [0, 256], sizes = [8, 256], strides = [1, 1]} : vector<8x512xf32> to vector<8x256xf32>
    %c1_27 = arith.constant 1 : index
    %c0_28 = arith.constant 0 : index
    %c0_29 = arith.constant 0 : index
    %136 = vector.load %arg5[%c1_27, %c0_28, %c0_29] : memref<2x8x256xf32, #tpu.memory_space<vmem>>, vector<1x8x256xf32>
    %137 = vector.shape_cast %136 : vector<1x8x256xf32> to vector<8x256xf32>
    %138 = vector.shape_cast %135 : vector<8x256xf32> to vector<1x8x256xf32>
    tpu.vector_store %arg5[%c1_27, %c0_28, %c0_29], %138 {strides = array<i32>} : memref<2x8x256xf32, #tpu.memory_space<vmem>>, vector<1x8x256xf32>,
    return
  }
}

</mosaic_0001>

<llo_original>
// kernel: dilconv_forward.1
$region0: #{dilconv_forward.1}
  #allocation0 [shape = 'u32[]', space=smem, size = 0x4, offset = 0x4, fixed_abs, tag = 'smem constant byte address 0x4 - core index']
  #allocation1 [shape = 'u32[72,128]{1,0:T(1,128)}', space=vmem, size = 0x9000, scoped, tag = 'internal scratch']
  %s0 = inlined_call_operand.vmem [shape: f32[2,4,256], index: 0, kind: input, shape index: {}]
  %s1 = inlined_call_operand.vmem [shape: f32[4,9], index: 1, kind: input, shape index: {}]
  %s2 = inlined_call_operand.vmem [shape: f32[8,4], index: 2, kind: input, shape index: {}]
  %s3 = inlined_call_operand.vmem [shape: f32[8,1], index: 3, kind: input, shape index: {}]
  %s4 = inlined_call_operand.vmem [shape: f32[8,1], index: 4, kind: input, shape index: {}]
  %s5 = inlined_call_operand.vmem [shape: f32[2,8,256], index: 5, kind: output, shape index: {}]
  %s6 = sld [smem:[#allocation0]]
  $region30: #{dilconv_forward.1} parent=0
    _
  %s8 = ssub.s32 1, %s6
  %s9 = scalar_select 0, %s8, %s6
  // Predicated region
  $region2: #{dilconv_forward.1} parent=0 // pred_check
    _
  $region3: #{dilconv_forward.1} parent=0 // pred_check_branch
    %11 = sbr.rel (0) target = $region5
  $region4: #{dilconv_forward.1} parent=0 // pred_region
    _
  $region5: #{dilconv_forward.1} parent=0 // pred_fallthru
    _
  // Predicated region
  $region6: #{dilconv_forward.1} parent=0 // pred_check
    _
  $region7: #{dilconv_forward.1} parent=0 // pred_check_branch
    %13 = sbr.rel (0) target = $region9
  $region8: #{dilconv_forward.1} parent=0 // pred_region
    _
  $region9: #{dilconv_forward.1} parent=0 // pred_fallthru
    _
  // Predicated region
  $region10: #{dilconv_forward.1} parent=0 // pred_check
    _
  $region11: #{dilconv_forward.1} parent=0 // pred_check_branch
    %15 = sbr.rel (0) target = $region13
  $region12: #{dilconv_forward.1} parent=0 // pred_region
    _
  $region13: #{dilconv_forward.1} parent=0 // pred_fallthru
    _
  // Predicated region
  $region14: #{dilconv_forward.1} parent=0 // pred_check
    _
  $region15: #{dilconv_forward.1} parent=0 // pred_check_branch
    %17 = sbr.rel (0) target = $region17
  $region16: #{dilconv_forward.1} parent=0 // pred_region
    _
  $region17: #{dilconv_forward.1} parent=0 // pred_fallthru
    _
  // Predicated region
  $region18: #{dilconv_forward.1} parent=0 // pred_check
    _
  $region19: #{dilconv_forward.1} parent=0 // pred_check_branch
    %19 = sbr.rel (0) target = $region21
  $region20: #{dilconv_forward.1} parent=0 // pred_region
    _
  $region21: #{dilconv_forward.1} parent=0 // pred_fallthru
    _
  %v20 = vlaneseq
  %v21 = vand.u32 %v20, 127
  %v22 = vadd.s32 %v21, 128
  %v23 = vadd.s32 %v21, 256
  %v24 = vadd.s32 %v21, 384
  %v25 = vand.u32 %v21, 255
  %v26 = vand.u32 %v22, 255
  %v27 = vand.u32 %v23, 255
  %v28 = vand.u32 %v24, 255
  %v29 = vshra.s32 %v25, 4
  %v30 = vshra.s32 %v26, 4
  %v31 = vshra.s32 %v27, 4
  %v32 = vshra.s32 %v28, 4
  %v33 = vand.u32 %v25, 15
  %v34 = vand.u32 %v26, 15
  %v35 = vand.u32 %v27, 15
  %v36 = vand.u32 %v28, 15
  %vm37 = vcmp.ge.s32.totalorder %v29, 2
  %vm38 = vcmp.ge.s32.totalorder %v30, 2
  %vm39 = vcmp.ge.s32.totalorder %v31, 2
  %vm40 = vcmp.ge.s32.totalorder %v32, 2
  %vm41 = vcmp.lt.s32.totalorder %v29, 18
  %vm42 = vcmp.lt.s32.totalorder %v30, 18
  %vm43 = vcmp.lt.s32.totalorder %v31, 18
  %vm44 = vcmp.lt.s32.totalorder %v32, 18
  %vm45 = vmand %vm37, %vm41
  %vm46 = vmand %vm38, %vm42
  %vm47 = vmand %vm39, %vm43
  %vm48 = vmand %vm40, %vm44
  %v49 = vsel %vm45, 1, 0
  %v50 = vsel %vm46, 1, 0
  %v51 = vsel %vm47, 1, 0
  %v52 = vsel %vm48, 1, 0
  %v53 = vcvt.s32.f32 %v49
  %v54 = vcvt.s32.f32 %v50
  %v55 = vcvt.s32.f32 %v51
  %v56 = vcvt.s32.f32 %v52
  %vm57 = vcmp.ge.s32.totalorder %v29, 4294967294
  %vm58 = vcmp.ge.s32.totalorder %v30, 4294967294
  %vm59 = vcmp.ge.s32.totalorder %v31, 4294967294
  %vm60 = vcmp.ge.s32.totalorder %v32, 4294967294
  %vm61 = vcmp.lt.s32.totalorder %v29, 14
  %vm62 = vcmp.lt.s32.totalorder %v30, 14
  %vm63 = vcmp.lt.s32.totalorder %v31, 14
  %vm64 = vcmp.lt.s32.totalorder %v32, 14
  %vm65 = vmand %vm57, %vm61
  %vm66 = vmand %vm58, %vm62
  %vm67 = vmand %vm59, %vm63
  %vm68 = vmand %vm60, %vm64
  %v69 = vsel %vm65, 1, 0
  %v70 = vsel %vm66, 1, 0
  %v71 = vsel %vm67, 1, 0
  %v72 = vsel %vm68, 1, 0
  %v73 = vcvt.s32.f32 %v69
  %v74 = vcvt.s32.f32 %v70
  %v75 = vcvt.s32.f32 %v71
  %v76 = vcvt.s32.f32 %v72
  %vm77 = vcmp.ge.s32.totalorder %v33, 2
  %vm78 = vcmp.ge.s32.totalorder %v34, 2
  %vm79 = vcmp.ge.s32.totalorder %v35, 2
  %vm80 = vcmp.ge.s32.totalorder %v36, 2
  %vm81 = vcmp.lt.s32.totalorder %v33, 18
  %vm82 = vcmp.lt.s32.totalorder %v34, 18
  %vm83 = vcmp.lt.s32.totalorder %v35, 18
  %vm84 = vcmp.lt.s32.totalorder %v36, 18
  %vm85 = vmand %vm77, %vm81
  %vm86 = vmand %vm78, %vm82
  %vm87 = vmand %vm79, %vm83
  %vm88 = vmand %vm80, %vm84
  %v89 = vsel %vm85, 1, 0
  %v90 = vsel %vm86, 1, 0
  %v91 = vsel %vm87, 1, 0
  %v92 = vsel %vm88, 1, 0
  %v93 = vcvt.s32.f32 %v89
  %v94 = vcvt.s32.f32 %v90
  %v95 = vcvt.s32.f32 %v91
  %v96 = vcvt.s32.f32 %v92
  %vm97 = vcmp.ge.s32.totalorder %v33, 4294967294
  %vm98 = vcmp.ge.s32.totalorder %v34, 4294967294
  %vm99 = vcmp.ge.s32.totalorder %v35, 4294967294
  %vm100 = vcmp.ge.s32.totalorder %v36, 4294967294
  %vm101 = vcmp.lt.s32.totalorder %v33, 14
  %vm102 = vcmp.lt.s32.totalorder %v34, 14
  %vm103 = vcmp.lt.s32.totalorder %v35, 14
  %vm104 = vcmp.lt.s32.totalorder %v36, 14
  %vm105 = vmand %vm97, %vm101
  %vm106 = vmand %vm98, %vm102
  %vm107 = vmand %vm99, %vm103
  %vm108 = vmand %vm100, %vm104
  %v109 = vsel %vm105, 1, 0
  %v110 = vsel %vm106, 1, 0
  %v111 = vsel %vm107, 1, 0
  %v112 = vsel %vm108, 1, 0
  %v113 = vcvt.s32.f32 %v109
  %v114 = vcvt.s32.f32 %v110
  %v115 = vcvt.s32.f32 %v111
  %v116 = vcvt.s32.f32 %v112
  %v117 = vld [vmem:[%s1] sm:$0xf]
  %v118 = vmul.f32 %v53, %v93
  %v119 = vmul.f32 %v54, %v94
  %v120 = vmul.f32 %v55, %v95
  %v121 = vmul.f32 %v56, %v96
  %123 = vset.pattern.permute.xlu0 0
  %124 = vperm.xlu0 %123, %v117
  %v125 = vpop.permute.xlu0 %124
  %v127 = vmul.f32 %v125, %v118
  %v128 = vmul.f32 %v125, %v119
  %v129 = vmul.f32 %v125, %v120
  %v130 = vmul.f32 %v125, %v121
  %131 = vset.pattern.permute.xlu0 1
  %132 = vperm.xlu0 %131, %v117
  %v133 = vpop.permute.xlu0 %132
  %v135 = vmul.f32 %v133, %v53
  %v136 = vmul.f32 %v133, %v54
  %v137 = vmul.f32 %v133, %v55
  %v138 = vmul.f32 %v133, %v56
  %v139 = vmul.f32 %v53, %v113
  %v140 = vmul.f32 %v54, %v114
  %v141 = vmul.f32 %v55, %v115
  %v142 = vmul.f32 %v56, %v116
  %143 = vset.pattern.permute.xlu0 2
  %144 = vperm.xlu0 %143, %v117
  %v145 = vpop.permute.xlu0 %144
  %v147 = vmul.f32 %v145, %v139
  %v148 = vmul.f32 %v145, %v140
  %v149 = vmul.f32 %v145, %v141
  %v150 = vmul.f32 %v145, %v142
  %151 = vset.pattern.permute.xlu0 3
  %152 = vperm.xlu0 %151, %v117
  %v153 = vpop.permute.xlu0 %152
  %v155 = vmul.f32 %v153, %v93
  %v156 = vmul.f32 %v153, %v94
  %v157 = vmul.f32 %v153, %v95
  %v158 = vmul.f32 %v153, %v96
  %159 = vset.pattern.permute.xlu0 5
  %160 = vperm.xlu0 %159, %v117
  %v161 = vpop.permute.xlu0 %160
  %v163 = vmul.f32 %v161, %v113
  %v164 = vmul.f32 %v161, %v114
  %v165 = vmul.f32 %v161, %v115
  %v166 = vmul.f32 %v161, %v116
  %v167 = vmul.f32 %v73, %v93
  %v168 = vmul.f32 %v74, %v94
  %v169 = vmul.f32 %v75, %v95
  %v170 = vmul.f32 %v76, %v96
  %171 = vset.pattern.permute.xlu0 6
  %172 = vperm.xlu0 %171, %v117
  %v173 = vpop.permute.xlu0 %172
  %v175 = vmul.f32 %v173, %v167
  %v176 = vmul.f32 %v173, %v168
  %v177 = vmul.f32 %v173, %v169
  %v178 = vmul.f32 %v173, %v170
  %179 = vset.pattern.permute.xlu0 7
  %180 = vperm.xlu0 %179, %v117
  %v181 = vpop.permute.xlu0 %180
  %v183 = vmul.f32 %v181, %v73
  %v184 = vmul.f32 %v181, %v74
  %v185 = vmul.f32 %v181, %v75
  %v186 = vmul.f32 %v181, %v76
  %v187 = vmul.f32 %v73, %v113
  %v188 = vmul.f32 %v74, %v114
  %v189 = vmul.f32 %v75, %v115
  %v190 = vmul.f32 %v76, %v116
  %191 = vset.pattern.permute.xlu0 8
  %192 = vperm.xlu0 %191, %v117
  %v193 = vpop.permute.xlu0 %192
  %v195 = vmul.f32 %v193, %v187
  %v196 = vmul.f32 %v193, %v188
  %v197 = vmul.f32 %v193, %v189
  %v198 = vmul.f32 %v193, %v190
  %v199 = vld [vmem:[%s0] sm:$0xff]
  %s200 = scalar_lea.vmem %s0, 8
  %v201 = vld [vmem:[%s200] sm:$0xff]
  %203 = vst [vmem:[#allocation1] ss:$2 sm:$0xff] %v199
  %v204 = vld.sshfl [vmem:[#allocation1] sm:$0xff pattern:$0x75316420]
  %v205 = vld.sshfl [vmem:[#allocation1 + $0x8] sm:$0xff pattern:$0x75316420]
  %209 = vst [vmem:[#allocation1] ss:$2 sm:$0xff] %v201
  %v210 = vld.sshfl [vmem:[#allocation1] sm:$0xff pattern:$0x75316420]
  %v211 = vld.sshfl [vmem:[#allocation1 + $0x8] sm:$0xff pattern:$0x75316420]
  %v214 = vmax.f32 %v204, 0.0
  %v215 = vmax.f32 %v205, 0.0
  %v216 = vmax.f32 %v210, 0.0
  %v217 = vmax.f32 %v211, 0.0
  %218 = vrot.lane.b32.xlu0 %v214, 34
  %v219 = vpop.permute.xlu0 %218
  %220 = vrot.lane.b32.xlu0 %v215, 34
  %v221 = vpop.permute.xlu0 %220
  %222 = vrot.lane.b32.xlu0 %v216, 34
  %v223 = vpop.permute.xlu0 %222
  %224 = vrot.lane.b32.xlu0 %v217, 34
  %v225 = vpop.permute.xlu0 %224
  %vm226 = vcmp.lt.s32.totalorder %v21, 34
  %v227 = vsel %vm226, %v223, %v225
  %v228 = vsel %vm226, %v221, %v223
  %v229 = vsel %vm226, %v219, %v221
  %v230 = vsel %vm226, %v225, %v219
  %v231 = vmul.f32 %v230, %v127
  %v232 = vmul.f32 %v229, %v128
  %v233 = vmul.f32 %v228, %v129
  %v234 = vmul.f32 %v227, %v130
  %v235 = vadd.f32 %v231, 0.0
  %v236 = vadd.f32 %v232, 0.0
  %v237 = vadd.f32 %v233, 0.0
  %v238 = vadd.f32 %v234, 0.0
  %239 = vrot.lane.b32.xlu0 %v214, 32
  %v240 = vpop.permute.xlu0 %239
  %241 = vrot.lane.b32.xlu0 %v215, 32
  %v242 = vpop.permute.xlu0 %241
  %243 = vrot.lane.b32.xlu0 %v216, 32
  %v244 = vpop.permute.xlu0 %243
  %245 = vrot.lane.b32.xlu0 %v217, 32
  %v246 = vpop.permute.xlu0 %245
  %vm247 = vcmp.lt.s32.totalorder %v21, 32
  %v248 = vsel %vm247, %v244, %v246
  %v249 = vsel %vm247, %v242, %v244
  %v250 = vsel %vm247, %v240, %v242
  %v251 = vsel %vm247, %v246, %v240
  %v252 = vmul.f32 %v251, %v135
  %v253 = vmul.f32 %v250, %v136
  %v254 = vmul.f32 %v249, %v137
  %v255 = vmul.f32 %v248, %v138
  %v256 = vadd.f32 %v235, %v252
  %v257 = vadd.f32 %v236, %v253
  %v258 = vadd.f32 %v237, %v254
  %v259 = vadd.f32 %v238, %v255
  %260 = vrot.lane.b32.xlu0 %v214, 30
  %v261 = vpop.permute.xlu0 %260
  %262 = vrot.lane.b32.xlu0 %v215, 30
  %v263 = vpop.permute.xlu0 %262
  %264 = vrot.lane.b32.xlu0 %v216, 30
  %v265 = vpop.permute.xlu0 %264
  %266 = vrot.lane.b32.xlu0 %v217, 30
  %v267 = vpop.permute.xlu0 %266
  %vm268 = vcmp.lt.s32.totalorder %v21, 30
  %v269 = vsel %vm268, %v265, %v267
  %v270 = vsel %vm268, %v263, %v265
  %v271 = vsel %vm268, %v261, %v263
  %v272 = vsel %vm268, %v267, %v261
  %v273 = vmul.f32 %v272, %v147
  %v274 = vmul.f32 %v271, %v148
  %v275 = vmul.f32 %v270, %v149
  %v276 = vmul.f32 %v269, %v150
  %v277 = vadd.f32 %v256, %v273
  %v278 = vadd.f32 %v257, %v274
  %v279 = vadd.f32 %v258, %v275
  %v280 = vadd.f32 %v259, %v276
  %281 = vrot.lane.b32.xlu0 %v214, 2
  %v282 = vpop.permute.xlu0 %281
  %283 = vrot.lane.b32.xlu0 %v215, 2
  %v284 = vpop.permute.xlu0 %283
  %285 = vrot.lane.b32.xlu0 %v216, 2
  %v286 = vpop.permute.xlu0 %285
  %287 = vrot.lane.b32.xlu0 %v217, 2
  %v288 = vpop.permute.xlu0 %287
  %vm289 = vcmp.lt.s32.totalorder %v21, 2
  %v290 = vsel %vm289, %v286, %v288
  %v291 = vsel %vm289, %v284, %v286
  %v292 = vsel %vm289, %v282, %v284
  %v293 = vsel %vm289, %v288, %v282
  %v294 = vmul.f32 %v293, %v155
  %v295 = vmul.f32 %v292, %v156
  %v296 = vmul.f32 %v291, %v157
  %v297 = vmul.f32 %v290, %v158
  %v298 = vadd.f32 %v277, %v294
  %v299 = vadd.f32 %v278, %v295
  %v300 = vadd.f32 %v279, %v296
  %v301 = vadd.f32 %v280, %v297
  %302 = vset.pattern.permute.xlu0 4
  %303 = vperm.xlu0 %302, %v117
  %v304 = vpop.permute.xlu0 %303
  %v306 = vmul.f32 %v214, %v304
  %v307 = vmul.f32 %v215, %v304
  %v308 = vmul.f32 %v216, %v304
  %v309 = vmul.f32 %v217, %v304
  %v310 = vadd.f32 %v298, %v306
  %v311 = vadd.f32 %v299, %v307
  %v312 = vadd.f32 %v300, %v308
  %v313 = vadd.f32 %v301, %v309
  %314 = vrot.lane.b32.xlu0 %v214, 126
  %v315 = vpop.permute.xlu0 %314
  %316 = vrot.lane.b32.xlu0 %v215, 126
  %v317 = vpop.permute.xlu0 %316
  %318 = vrot.lane.b32.xlu0 %v216, 126
  %v319 = vpop.permute.xlu0 %318
  %320 = vrot.lane.b32.xlu0 %v217, 126
  %v321 = vpop.permute.xlu0 %320
  %vm322 = vcmp.lt.s32.totalorder %v21, 126
  %v323 = vsel %vm322, %v319, %v321
  %v324 = vsel %vm322, %v317, %v319
  %v325 = vsel %vm322, %v315, %v317
  %v326 = vsel %vm322, %v321, %v315
  %v327 = vmul.f32 %v325, %v163
  %v328 = vmul.f32 %v324, %v164
  %v329 = vmul.f32 %v323, %v165
  %v330 = vmul.f32 %v326, %v166
  %v331 = vadd.f32 %v310, %v327
  %v332 = vadd.f32 %v311, %v328
  %v333 = vadd.f32 %v312, %v329
  %v334 = vadd.f32 %v313, %v330
  %335 = vrot.lane.b32.xlu0 %v214, 98
  %v336 = vpop.permute.xlu0 %335
  %337 = vrot.lane.b32.xlu0 %v215, 98
  %v338 = vpop.permute.xlu0 %337
  %339 = vrot.lane.b32.xlu0 %v216, 98
  %v340 = vpop.permute.xlu0 %339
  %341 = vrot.lane.b32.xlu0 %v217, 98
  %v342 = vpop.permute.xlu0 %341
  %vm343 = vcmp.lt.s32.totalorder %v21, 98
  %v344 = vsel %vm343, %v340, %v342
  %v345 = vsel %vm343, %v338, %v340
  %v346 = vsel %vm343, %v336, %v338
  %v347 = vsel %vm343, %v342, %v336
  %v348 = vmul.f32 %v346, %v175
  %v349 = vmul.f32 %v345, %v176
  %v350 = vmul.f32 %v344, %v177
  %v351 = vmul.f32 %v347, %v178
  %v352 = vadd.f32 %v331, %v348
  %v353 = vadd.f32 %v332, %v349
  %v354 = vadd.f32 %v333, %v350
  %v355 = vadd.f32 %v334, %v351
  %356 = vrot.lane.b32.xlu0 %v214, 96
  %v357 = vpop.permute.xlu0 %356
  %358 = vrot.lane.b32.xlu0 %v215, 96
  %v359 = vpop.permute.xlu0 %358
  %360 = vrot.lane.b32.xlu0 %v216, 96
  %v361 = vpop.permute.xlu0 %360
  %362 = vrot.lane.b32.xlu0 %v217, 96
  %v363 = vpop.permute.xlu0 %362
  %vm364 = vcmp.lt.s32.totalorder %v21, 96
  %v365 = vsel %vm364, %v361, %v363
  %v366 = vsel %vm364, %v359, %v361
  %v367 = vsel %vm364, %v357, %v359
  %v368 = vsel %vm364, %v363, %v357
  %v369 = vmul.f32 %v367, %v183
  %v370 = vmul.f32 %v366, %v184
  %v371 = vmul.f32 %v365, %v185
  %v372 = vmul.f32 %v368, %v186
  %v373 = vadd.f32 %v352, %v369
  %v374 = vadd.f32 %v353, %v370
  %v375 = vadd.f32 %v354, %v371
  %v376 = vadd.f32 %v355, %v372
  %377 = vrot.lane.b32.xlu0 %v214, 94
  %v378 = vpop.permute.xlu0 %377
  %379 = vrot.lane.b32.xlu0 %v215, 94
  %v380 = vpop.permute.xlu0 %379
  %381 = vrot.lane.b32.xlu0 %v216, 94
  %v382 = vpop.permute.xlu0 %381
  %383 = vrot.lane.b32.xlu0 %v217, 94
  %v384 = vpop.permute.xlu0 %383
  %vm385 = vcmp.lt.s32.totalorder %v21, 94
  %v386 = vsel %vm385, %v382, %v384
  %v387 = vsel %vm385, %v380, %v382
  %v388 = vsel %vm385, %v378, %v380
  %v389 = vsel %vm385, %v384, %v378
  %v390 = vmul.f32 %v388, %v195
  %v391 = vmul.f32 %v387, %v196
  %v392 = vmul.f32 %v386, %v197
  %v393 = vmul.f32 %v389, %v198
  %v394 = vadd.f32 %v373, %v390
  %v395 = vadd.f32 %v374, %v391
  %v396 = vadd.f32 %v375, %v392
  %v397 = vadd.f32 %v376, %v393
  %v398 = vld [vmem:[%s2] sm:$0xff]
  %vm399 = vcmask 31744
  %v401 = vsel %vm399, %v398, 0
  %vm403 = vcmask 1043456
  %v405 = vsel %vm403, %v394, 0
  %v408 = vsel %vm403, %v395, 0
  %v411 = vsel %vm403, %v396, 0
  %v414 = vsel %vm403, %v397, 0
  %416 = vmatpush.msra.mxu0 0.0
  %417 = vmatpush.msra.mxu0 0.0
  %418 = vmatpush.msra.mxu0 0.0
  %419 = vmatpush.msra.mxu0 0.0
  %420 = vmatpush.msra.mxu0 0.0
  %421 = vmatpush.msra.mxu0 0.0
  %422 = vmatpush.msra.mxu0 0.0
  %423 = vmatpush.msra.mxu0 0.0
  %424 = vmatpush.msra.mxu0 0.0
  %425 = vmatpush.msra.mxu0 0.0
  %426 = vmatpush.msra.mxu0 0.0
  %427 = vmatpush.msra.mxu0 0.0
  %428 = vmatpush.msra.mxu0 0.0
  %429 = vmatpush.msra.mxu0 0.0
  %430 = vmatpush.msra.mxu0 0.0
  %431 = vmatpush.msra.mxu0 %v405
  %432 = vmatmul.f32.gmra.mxu0 %v401
  %v433 = vpop.f32.mrf.mxu0
  %v434 = vadd.f32 0.0, %v433
  %435 = vdwg.mxu0
  %436 = vmatpush.msra.mxu0 0.0
  %437 = vmatpush.msra.mxu0 0.0
  %438 = vmatpush.msra.mxu0 0.0
  %439 = vmatpush.msra.mxu0 0.0
  %440 = vmatpush.msra.mxu0 0.0
  %441 = vmatpush.msra.mxu0 0.0
  %442 = vmatpush.msra.mxu0 0.0
  %443 = vmatpush.msra.mxu0 0.0
  %444 = vmatpush.msra.mxu0 0.0
  %445 = vmatpush.msra.mxu0 0.0
  %446 = vmatpush.msra.mxu0 0.0
  %447 = vmatpush.msra.mxu0 0.0
  %448 = vmatpush.msra.mxu0 0.0
  %449 = vmatpush.msra.mxu0 0.0
  %450 = vmatpush.msra.mxu0 0.0
  %451 = vmatpush.msra.mxu0 %v408
  %452 = vmatmul.f32.gmra.mxu0 %v401
  %v453 = vpop.f32.mrf.mxu0
  %v454 = vadd.f32 0.0, %v453
  %455 = vdwg.mxu0
  %456 = vmatpush.msra.mxu0 0.0
  %457 = vmatpush.msra.mxu0 0.0
  %458 = vmatpush.msra.mxu0 0.0
  %459 = vmatpush.msra.mxu0 0.0
  %460 = vmatpush.msra.mxu0 0.0
  %461 = vmatpush.msra.mxu0 0.0
  %462 = vmatpush.msra.mxu0 0.0
  %463 = vmatpush.msra.mxu0 0.0
  %464 = vmatpush.msra.mxu0 0.0
  %465 = vmatpush.msra.mxu0 0.0
  %466 = vmatpush.msra.mxu0 0.0
  %467 = vmatpush.msra.mxu0 0.0
  %468 = vmatpush.msra.mxu0 0.0
  %469 = vmatpush.msra.mxu0 0.0
  %470 = vmatpush.msra.mxu0 0.0
  %471 = vmatpush.msra.mxu0 %v411
  %472 = vmatmul.f32.gmra.mxu0 %v401
  %v473 = vpop.f32.mrf.mxu0
  %v474 = vadd.f32 0.0, %v473
  %475 = vdwg.mxu0
  %476 = vmatpush.msra.mxu0 0.0
  %477 = vmatpush.msra.mxu0 0.0
  %478 = vmatpush.msra.mxu0 0.0
  %479 = vmatpush.msra.mxu0 0.0
  %480 = vmatpush.msra.mxu0 0.0
  %481 = vmatpush.msra.mxu0 0.0
  %482 = vmatpush.msra.mxu0 0.0
  %483 = vmatpush.msra.mxu0 0.0
  %484 = vmatpush.msra.mxu0 0.0
  %485 = vmatpush.msra.mxu0 0.0
  %486 = vmatpush.msra.mxu0 0.0
  %487 = vmatpush.msra.mxu0 0.0
  %488 = vmatpush.msra.mxu0 0.0
  %489 = vmatpush.msra.mxu0 0.0
  %490 = vmatpush.msra.mxu0 0.0
  %491 = vmatpush.msra.mxu0 %v414
  %492 = vmatmul.f32.gmra.mxu0 %v401
  %v493 = vpop.f32.mrf.mxu0
  %v494 = vadd.f32 0.0, %v493
  %495 = vdwg.mxu0
  %v496 = vadd.f32 %v434, %v454
  %v497 = vadd.f32 %v496, %v474
  %v498 = vadd.f32 %v497, %v494
  %499 = vadd.xlane.f32.xlu0 %v498
  %v500 = vpop.xlane.xlu0 %499
  %v501 = vmul.f32 %v500, 0.001953125
  %v502 = vsub.f32 %v434, %v501
  %v503 = vsub.f32 %v454, %v501
  %v504 = vsub.f32 %v474, %v501
  %v505 = vsub.f32 %v494, %v501
  %v506 = vmul.f32 %v502, %v502
  %v507 = vmul.f32 %v503, %v503
  %v508 = vmul.f32 %v504, %v504
  %v509 = vmul.f32 %v505, %v505
  %v510 = vadd.f32 %v506, %v507
  %v511 = vadd.f32 %v510, %v508
  %v512 = vadd.f32 %v511, %v509
  %513 = vadd.xlane.f32.xlu0 %v512
  %v514 = vpop.xlane.xlu0 %513
  %v515 = vmul.f32 %v514, 0.001953125
  %v516 = vld [vmem:[%s3] sm:$0xff]
  %v517 = vadd.f32 %v515, 1e-05
  %v518 = vrsqrt.pop %v517
  %v519 = vmul.f32 %v518, %v517
  %v520 = vmul.f32 %v519, %v518
  %v521 = vmul.f32 0.5, %v520
  %v522 = vsub.f32 1.5, %v521
  %v523 = vmul.f32 %v518, %v522
  %vm524 = vweird.f32 %v517
  %vm525 = vweird.f32 %v518
  %vm526 = vmor %vm524, %vm525
  %v527 = vsel %vm526, %v518, %v523
  %v528 = vmul.f32 %v516, %v527
  %530 = vset.pattern.permute.xlu0 0
  %531 = vperm.xlu0 %530, %v528
  %v532 = vpop.permute.xlu0 %531
  %v534 = vmul.f32 %v502, %v532
  %v535 = vmul.f32 %v503, %v532
  %v536 = vmul.f32 %v504, %v532
  %v537 = vmul.f32 %v505, %v532
  %v538 = vld [vmem:[%s4] sm:$0xff]
  %540 = vset.pattern.permute.xlu0 0
  %541 = vperm.xlu0 %540, %v538
  %v542 = vpop.permute.xlu0 %541
  %v544 = vadd.f32 %v534, %v542
  %v545 = vadd.f32 %v535, %v542
  %v546 = vadd.f32 %v536, %v542
  %v547 = vadd.f32 %v537, %v542
  %548 = vst [vmem:[%s5] sm:$0xff] %v544
  %549 = vst [vmem:[%s5 + $0x8] sm:$0xff] %v545
  %s550 = scalar_lea.vmem %s5, 16
  %551 = vst [vmem:[%s550] sm:$0xff] %v546
  %552 = vst [vmem:[%s550 + $0x8] sm:$0xff] %v547
  // Predicated region
  $region22: #{dilconv_forward.1} parent=0 // pred_check
    _
  $region23: #{dilconv_forward.1} parent=0 // pred_check_branch
    %554 = sbr.rel (0) target = $region25
  $region24: #{dilconv_forward.1} parent=0 // pred_region
    _
  $region25: #{dilconv_forward.1} parent=0 // pred_fallthru
    _
  // Predicated region
  $region26: #{dilconv_forward.1} parent=0 // pred_check
    _
  $region27: #{dilconv_forward.1} parent=0 // pred_check_branch
    %556 = sbr.rel (0) target = $region29
  $region28: #{dilconv_forward.1} parent=0 // pred_region
    _
  $region29: #{dilconv_forward.1} parent=0 // pred_fallthru
    _

</llo_original>
